<compile_context>
chip_gen: v7x
topology: tpu7x:2x2x1
jax: 0.10.0
libtpu: 0.0.40
codegen_flags: <defaults>
</compile_context>

<pallas_src>
import math

import jax
import jax.numpy as jnp
from jax.experimental import pallas as pl
from jax.experimental.pallas import tpu as pltpu

K_IN = 28 * 28        # 784 (kept unpadded; block dim == full array dim)
H1, H2 = 256, 128     # already lane-aligned
H3_PAD = 128          # 64  -> 128
OUT_PAD = 128         # 10  -> 128
N_OUT = 10


def mlp_kernel(x_ref, w1_ref, b1_ref, w2_ref, b2_ref,
               w3_ref, b3_ref, w4_ref, b4_ref, o_ref):
    # x_ref: (TM, 784) f32 tile (pipelined). Weights bf16, VMEM-resident.
    # Biases f32, added to the f32 accumulator. Four MXU matmuls with f32
    # accumulation, ReLU on the VPU, bf16 re-cast between layers for the
    # native MXU input path. Output stored bf16, lane-dense (TM, 128).
    x = x_ref[...].astype(jnp.bfloat16)                      # in-kernel cast
    h = jnp.dot(x, w1_ref[...], preferred_element_type=jnp.float32) + b1_ref[...]
    h = jnp.maximum(h, 0.0).astype(jnp.bfloat16)
    h = jnp.dot(h, w2_ref[...], preferred_element_type=jnp.float32) + b2_ref[...]
    h = jnp.maximum(h, 0.0).astype(jnp.bfloat16)
    h = jnp.dot(h, w3_ref[...], preferred_element_type=jnp.float32) + b3_ref[...]
    h = jnp.maximum(h, 0.0).astype(jnp.bfloat16)
    out = jnp.dot(h, w4_ref[...], preferred_element_type=jnp.float32) + b4_ref[...]
    o_ref[...] = out.astype(o_ref.dtype)                     # bf16 store


def deep_model_forward(x_nchw, params, tm=512):
    """x_nchw: (B, 1, 28, 28) float32. Returns logits (B, 10) float32."""
    B = x_nchw.shape[0]
    x_flat = x_nchw.reshape(B, K_IN).astype(jnp.float32)     # == torch view(B, -1)

    # Tile size: multiple of 16 (bf16 packs 2 rows per sublane).
    tm = max(16, (int(tm) // 16) * 16)
    if B <= tm:
        b_pad = max(16, ((B + 15) // 16) * 16)
        # Keep >= 2 grid steps when the padded batch allows it, so the
        # "parallel" batch axis can be sharded across both v7x TensorCores.
        tm = b_pad // 2 if (b_pad >= 32 and b_pad % 32 == 0) else b_pad
    else:
        b_pad = pl.cdiv(B, tm) * tm                          # grid >= 2 here

    if b_pad != B:
        x_flat = jnp.pad(x_flat, ((0, b_pad - B), (0, 0)))   # no-op when aligned

    w1, b1, w2, b2, w3, b3, w4, b4 = params
    grid = (b_pad // tm,)

    const = lambda i: (0, 0)   # weights/biases: resident across all grid steps
    in_specs = [
        pl.BlockSpec((tm, K_IN), lambda i: (i, 0)),          # x tile (f32, pipelined)
        pl.BlockSpec((K_IN, H1), const),
        pl.BlockSpec((1, H1), const),
        pl.BlockSpec((H1, H2), const),
        pl.BlockSpec((1, H2), const),
        pl.BlockSpec((H2, H3_PAD), const),
        pl.BlockSpec((1, H3_PAD), const),
        pl.BlockSpec((H3_PAD, OUT_PAD), const),
        pl.BlockSpec((1, OUT_PAD), const),
    ]
    out_spec = pl.BlockSpec((tm, OUT_PAD), lambda i: (i, 0))

    weight_bytes = 2 * (K_IN * H1 + H1 * H2 + H2 * H3_PAD + H3_PAD * OUT_PAD)
    bias_bytes = 4 * (H1 + H2 + H3_PAD + OUT_PAD)
    flops = 2 * b_pad * (K_IN * H1 + H1 * H2 + H2 * H3_PAD + H3_PAD * OUT_PAD)
    bytes_accessed = (weight_bytes + bias_bytes
                      + 4 * b_pad * K_IN           # f32 x read (only copy)
                      + 2 * b_pad * OUT_PAD)       # bf16 out write
    cost = pl.CostEstimate(flops=flops, transcendentals=0,
                           bytes_accessed=bytes_accessed)

    out = pl.pallas_call(
        mlp_kernel,
        out_shape=jax.ShapeDtypeStruct((b_pad, OUT_PAD), jnp.bfloat16),
        grid=grid,
        in_specs=in_specs,
        out_specs=out_spec,
        compiler_params=pltpu.CompilerParams(
            dimension_semantics=("parallel",)),
        cost_estimate=cost,
    )(x_flat, w1, b1, w2, b2, w3, b3, w4, b4)

    return out[:B, :N_OUT].astype(jnp.float32)


def init_linear(key, fan_in, fan_out, k_store, n_store):
    """PyTorch nn.Linear default init (U(-1/sqrt(in), 1/sqrt(in))), stored as
    (in, out), zero-padded to (k_store, n_store), weights bf16, biases f32."""
    kw, kb = jax.random.split(key)
    bound = 1.0 / math.sqrt(fan_in)
    w = jax.random.uniform(kw, (fan_in, fan_out), jnp.float32, -bound, bound)
    b = jax.random.uniform(kb, (1, fan_out), jnp.float32, -bound, bound)
    w = jnp.pad(w, ((0, k_store - fan_in), (0, n_store - fan_out)))
    b = jnp.pad(b, ((0, 0), (0, n_store - fan_out)))
    return w.astype(jnp.bfloat16), b.astype(jnp.float32)


def make_params(key):
    k1, k2, k3, k4 = jax.random.split(key, 4)
    w1, b1 = init_linear(k1, K_IN, 256, K_IN, H1)          # (784, 256) no K pad
    w2, b2 = init_linear(k2, 256, 128, H1, H2)             # (256, 128)
    w3, b3 = init_linear(k3, 128, 64, H2, H3_PAD)          # (128, 128)
    w4, b4 = init_linear(k4, 64, 10, H3_PAD, OUT_PAD)      # (128, 128)
    return (w1, b1, w2, b2, w3, b3, w4, b4)


if __name__ == "__main__":
    key = jax.random.PRNGKey(0)
    k_params, k_x = jax.random.split(key)

    params = make_params(k_params)
    # Small MNIST-like batch, NCHW like PyTorch.
    x = jax.random.normal(k_x, (8, 1, 28, 28), dtype=jnp.float32)

    logits = deep_model_forward(x, params)
    jax.block_until_ready(logits)
    assert logits.shape == (8, N_OUT)

    # Plain-JAX reference with identical bf16 casting / f32 accumulation.
    w1, b1, w2, b2, w3, b3, w4, b4 = params
    xf = x.reshape(x.shape[0], -1).astype(jnp.bfloat16)
    r = jnp.maximum(jnp.dot(xf, w1, preferred_element_type=jnp.float32) + b1, 0.0)
    r = jnp.maximum(jnp.dot(r.astype(jnp.bfloat16), w2,
                            preferred_element_type=jnp.float32) + b2, 0.0)
    r = jnp.maximum(jnp.dot(r.astype(jnp.bfloat16), w3,
                            preferred_element_type=jnp.float32) + b3, 0.0)
    r = jnp.dot(r.astype(jnp.bfloat16), w4,
                preferred_element_type=jnp.float32) + b4
    ref = r[:, :N_OUT].astype(jnp.bfloat16).astype(jnp.float32)

    assert jnp.allclose(logits, ref, atol=2e-2, rtol=2e-2), (
        float(jnp.max(jnp.abs(logits - ref))))

    print("KERNEL_OK")
</pallas_src>

<mosaic_0001>
module attributes {stable_mosaic.version = 11 : i64} {
  func.func @mlp_kernel(%arg0: i32, %arg1: memref<16x784xf32, #tpu.memory_space<vmem>>, %arg2: memref<784x256xbf16, #tpu.memory_space<vmem>>, %arg3: memref<1x256xf32, #tpu.memory_space<vmem>>, %arg4: memref<256x128xbf16, #tpu.memory_space<vmem>>, %arg5: memref<1x128xf32, #tpu.memory_space<vmem>>, %arg6: memref<128x128xbf16, #tpu.memory_space<vmem>>, %arg7: memref<1x128xf32, #tpu.memory_space<vmem>>, %arg8: memref<128x128xbf16, #tpu.memory_space<vmem>>, %arg9: memref<1x128xf32, #tpu.memory_space<vmem>>, %arg10: memref<16x128xbf16, #tpu.memory_space<vmem>>) attributes {dimension_semantics = [#tpu.dimension_semantics<parallel>], iteration_bounds = array<i64: 1>, scalar_prefetch = 0 : i64, scratch_operands = 0 : i64, tpu.core_type = #tpu.core_type<tc>, window_params = [{transform_indices = @transform_0, window_bounds = array<i64: 16, 784>}, {pipeline_mode = #tpu.pipeline_mode<synchronous>, transform_indices = @transform_1, window_bounds = array<i64: 784, 256>}, {pipeline_mode = #tpu.pipeline_mode<synchronous>, transform_indices = @transform_2, window_bounds = array<i64: 1, 256>}, {pipeline_mode = #tpu.pipeline_mode<synchronous>, transform_indices = @transform_3, window_bounds = array<i64: 256, 128>}, {pipeline_mode = #tpu.pipeline_mode<synchronous>, transform_indices = @transform_4, window_bounds = array<i64: 1, 128>}, {pipeline_mode = #tpu.pipeline_mode<synchronous>, transform_indices = @transform_5, window_bounds = array<i64: 128, 128>}, {pipeline_mode = #tpu.pipeline_mode<synchronous>, transform_indices = @transform_6, window_bounds = array<i64: 1, 128>}, {pipeline_mode = #tpu.pipeline_mode<synchronous>, transform_indices = @transform_7, window_bounds = array<i64: 128, 128>}, {pipeline_mode = #tpu.pipeline_mode<synchronous>, transform_indices = @transform_8, window_bounds = array<i64: 1, 128>}, {transform_indices = @transform_9, window_bounds = array<i64: 16, 128>}]} {
    %c0 = arith.constant 0 : index
    %c0_0 = arith.constant 0 : index
    %0 = vector.load %arg1[%c0, %c0_0] : memref<16x784xf32, #tpu.memory_space<vmem>>, vector<16x784xf32>
    %1 = arith.truncf %0 : vector<16x784xf32> to vector<16x784xbf16>
    %c0_1 = arith.constant 0 : index
    %c0_2 = arith.constant 0 : index
    %2 = vector.load %arg2[%c0_1, %c0_2] : memref<784x256xbf16, #tpu.memory_space<vmem>>, vector<784x256xbf16>
    %cst = arith.constant dense<0.000000e+00> : vector<16x256xf32>
    %3 = tpu.matmul %1, %2, %cst {dimension_numbers = #tpu.dot_dimension_numbers<[1], [0], [0], [1], [0, 0, 1, 1], [], []>} : vector<16x784xbf16>, vector<784x256xbf16>, vector<16x256xf32> -> vector<16x256xf32>
    %c0_3 = arith.constant 0 : index
    %c0_4 = arith.constant 0 : index
    %4 = vector.load %arg3[%c0_3, %c0_4] : memref<1x256xf32, #tpu.memory_space<vmem>>, vector<1x256xf32>
    %5 = vector.broadcast %4 : vector<1x256xf32> to vector<16x256xf32>
    %6 = arith.addf %3, %5 : vector<16x256xf32>
    %cst_5 = arith.constant 0.000000e+00 : f32
    %7 = vector.broadcast %cst_5 : f32 to vector<16x256xf32>
    %8 = arith.maximumf %6, %7 : vector<16x256xf32>
    %9 = arith.truncf %8 : vector<16x256xf32> to vector<16x256xbf16>
    %c0_6 = arith.constant 0 : index
    %c0_7 = arith.constant 0 : index
    %10 = vector.load %arg4[%c0_6, %c0_7] : memref<256x128xbf16, #tpu.memory_space<vmem>>, vector<256x128xbf16>
    %cst_8 = arith.constant dense<0.000000e+00> : vector<16x128xf32>
    %11 = tpu.matmul %9, %10, %cst_8 {dimension_numbers = #tpu.dot_dimension_numbers<[1], [0], [0], [1], [0, 0, 1, 1], [], []>} : vector<16x256xbf16>, vector<256x128xbf16>, vector<16x128xf32> -> vector<16x128xf32>
    %c0_9 = arith.constant 0 : index
    %c0_10 = arith.constant 0 : index
    %12 = vector.load %arg5[%c0_9, %c0_10] : memref<1x128xf32, #tpu.memory_space<vmem>>, vector<1x128xf32>
    %13 = vector.broadcast %12 : vector<1x128xf32> to vector<16x128xf32>
    %14 = arith.addf %11, %13 : vector<16x128xf32>
    %cst_11 = arith.constant 0.000000e+00 : f32
    %15 = vector.broadcast %cst_11 : f32 to vector<16x128xf32>
    %16 = arith.maximumf %14, %15 : vector<16x128xf32>
    %17 = arith.truncf %16 : vector<16x128xf32> to vector<16x128xbf16>
    %c0_12 = arith.constant 0 : index
    %c0_13 = arith.constant 0 : index
    %18 = vector.load %arg6[%c0_12, %c0_13] : memref<128x128xbf16, #tpu.memory_space<vmem>>, vector<128x128xbf16>
    %cst_14 = arith.constant dense<0.000000e+00> : vector<16x128xf32>
    %19 = tpu.matmul %17, %18, %cst_14 {dimension_numbers = #tpu.dot_dimension_numbers<[1], [0], [0], [1], [0, 0, 1, 1], [], []>} : vector<16x128xbf16>, vector<128x128xbf16>, vector<16x128xf32> -> vector<16x128xf32>
    %c0_15 = arith.constant 0 : index
    %c0_16 = arith.constant 0 : index
    %20 = vector.load %arg7[%c0_15, %c0_16] : memref<1x128xf32, #tpu.memory_space<vmem>>, vector<1x128xf32>
    %21 = vector.broadcast %20 : vector<1x128xf32> to vector<16x128xf32>
    %22 = arith.addf %19, %21 : vector<16x128xf32>
    %cst_17 = arith.constant 0.000000e+00 : f32
    %23 = vector.broadcast %cst_17 : f32 to vector<16x128xf32>
    %24 = arith.maximumf %22, %23 : vector<16x128xf32>
    %25 = arith.truncf %24 : vector<16x128xf32> to vector<16x128xbf16>
    %c0_18 = arith.constant 0 : index
    %c0_19 = arith.constant 0 : index
    %26 = vector.load %arg8[%c0_18, %c0_19] : memref<128x128xbf16, #tpu.memory_space<vmem>>, vector<128x128xbf16>
    %cst_20 = arith.constant dense<0.000000e+00> : vector<16x128xf32>
    %27 = tpu.matmul %25, %26, %cst_20 {dimension_numbers = #tpu.dot_dimension_numbers<[1], [0], [0], [1], [0, 0, 1, 1], [], []>} : vector<16x128xbf16>, vector<128x128xbf16>, vector<16x128xf32> -> vector<16x128xf32>
    %c0_21 = arith.constant 0 : index
    %c0_22 = arith.constant 0 : index
    %28 = vector.load %arg9[%c0_21, %c0_22] : memref<1x128xf32, #tpu.memory_space<vmem>>, vector<1x128xf32>
    %29 = vector.broadcast %28 : vector<1x128xf32> to vector<16x128xf32>
    %30 = arith.addf %27, %29 : vector<16x128xf32>
    %31 = arith.truncf %30 : vector<16x128xf32> to vector<16x128xbf16>
    %c0_23 = arith.constant 0 : index
    %c0_24 = arith.constant 0 : index
    %32 = vector.load %arg10[%c0_23, %c0_24] : memref<16x128xbf16, #tpu.memory_space<vmem>>, vector<16x128xbf16>
    tpu.vector_store %arg10[%c0_23, %c0_24], %31 {strides = array<i32>} : memref<16x128xbf16, #tpu.memory_space<vmem>>, vector<16x128xbf16>,
    return
  }
  func.func @transform_0(%arg0: i32) -> (i32, i32) {
    %c0_i32 = arith.constant 0 : i32
    %c0_i32_0 = arith.constant 0 : i32
    return %arg0, %c0_i32 : i32, i32
  }
  func.func @transform_1(%arg0: i32) -> (i32, i32) {
    %c0_i32 = arith.constant 0 : i32
    %c0_i32_0 = arith.constant 0 : i32
    %c0_i32_1 = arith.constant 0 : i32
    return %c0_i32, %c0_i32_0 : i32, i32
  }
  func.func @transform_2(%arg0: i32) -> (i32, i32) {
    %c0_i32 = arith.constant 0 : i32
    %c0_i32_0 = arith.constant 0 : i32
    %c0_i32_1 = arith.constant 0 : i32
    return %c0_i32, %c0_i32_0 : i32, i32
  }
  func.func @transform_3(%arg0: i32) -> (i32, i32) {
    %c0_i32 = arith.constant 0 : i32
    %c0_i32_0 = arith.constant 0 : i32
    %c0_i32_1 = arith.constant 0 : i32
    return %c0_i32, %c0_i32_0 : i32, i32
  }
  func.func @transform_4(%arg0: i32) -> (i32, i32) {
    %c0_i32 = arith.constant 0 : i32
    %c0_i32_0 = arith.constant 0 : i32
    %c0_i32_1 = arith.constant 0 : i32
    return %c0_i32, %c0_i32_0 : i32, i32
  }
  func.func @transform_5(%arg0: i32) -> (i32, i32) {
    %c0_i32 = arith.constant 0 : i32
    %c0_i32_0 = arith.constant 0 : i32
    %c0_i32_1 = arith.constant 0 : i32
    return %c0_i32, %c0_i32_0 : i32, i32
  }
  func.func @transform_6(%arg0: i32) -> (i32, i32) {
    %c0_i32 = arith.constant 0 : i32
    %c0_i32_0 = arith.constant 0 : i32
    %c0_i32_1 = arith.constant 0 : i32
    return %c0_i32, %c0_i32_0 : i32, i32
  }
  func.func @transform_7(%arg0: i32) -> (i32, i32) {
    %c0_i32 = arith.constant 0 : i32
    %c0_i32_0 = arith.constant 0 : i32
    %c0_i32_1 = arith.constant 0 : i32
    return %c0_i32, %c0_i32_0 : i32, i32
  }
  func.func @transform_8(%arg0: i32) -> (i32, i32) {
    %c0_i32 = arith.constant 0 : i32
    %c0_i32_0 = arith.constant 0 : i32
    %c0_i32_1 = arith.constant 0 : i32
    return %c0_i32, %c0_i32_0 : i32, i32
  }
  func.func @transform_9(%arg0: i32) -> (i32, i32) {
    %c0_i32 = arith.constant 0 : i32
    %c0_i32_0 = arith.constant 0 : i32
    return %arg0, %c0_i32 : i32, i32
  }
}

</mosaic_0001>

<llo_original>
// kernel: tpu_custom_call.1
$region0: #{tpu_custom_call.1}
  #allocation0 [shape = 'u32[]', space=smem, size = 0x4, offset = 0x4, fixed_abs, tag = 'smem constant byte address 0x4 - core index']
  #allocation1 [shape = 'u32[144,128]{1,0:T(1,128)}', space=vmem, size = 0x12000, scoped, tag = 'internal scratch']
  %s0 = inlined_call_operand.hbm [shape: f32[16,784], index: 0, kind: input, shape index: {}]
  %s1 = inlined_call_operand.hbm [shape: bf16[784,256], index: 1, kind: input, shape index: {}]
  %s2 = inlined_call_operand.vmem [shape: f32[1,256], index: 2, kind: input, shape index: {}]
  %s3 = inlined_call_operand.hbm [shape: bf16[256,128], index: 3, kind: input, shape index: {}]
  %s4 = inlined_call_operand.vmem [shape: f32[1,128], index: 4, kind: input, shape index: {}]
  %s5 = inlined_call_operand.hbm [shape: bf16[128,128], index: 5, kind: input, shape index: {}]
  %s6 = inlined_call_operand.vmem [shape: f32[1,128], index: 6, kind: input, shape index: {}]
  %s7 = inlined_call_operand.hbm [shape: bf16[128,128], index: 7, kind: input, shape index: {}]
  %s8 = inlined_call_operand.vmem [shape: f32[1,128], index: 8, kind: input, shape index: {}]
  %s9 = inlined_call_operand.hbm [shape: bf16[16,128], index: 9, kind: output, shape index: {}]
  %s10 = sld [smem:[#allocation0]]
  $region66: #{tpu_custom_call.1} parent=0
    _
  %s12 = ssub.s32 1, %s10
  %s13 = scalar_select 0, %s12, %s10
  $region1: #{tpu_custom_call.1} parent=0
    #allocation2 [shape = 'u8[57344]{0}', space=vmem, size = 0xe000, scoped, tag = 'input window, operand 0, single buffered']
    #allocation3 [shape = 's32[1]{0}', space=sflag, size = 0x4, scoped, tag = 'scoped memory for tpu_custom_call.1']
    #allocation4 [shape = 's32[1]{0}', space=sflag, size = 0x4, scoped, tag = 'scoped memory for tpu_custom_call.1']
    #allocation5 [shape = 'u8[401408]{0}', space=vmem, size = 0x62000, scoped, tag = 'input window, operand 1, single buffered']
    #allocation6 [shape = 's32[1]{0}', space=sflag, size = 0x4, scoped, tag = 'scoped memory for tpu_custom_call.1']
    #allocation7 [shape = 'u8[65536]{0}', space=vmem, size = 0x10000, scoped, tag = 'input window, operand 3, single buffered']
    #allocation8 [shape = 'u8[32768]{0}', space=vmem, size = 0x8000, scoped, tag = 'input window, operand 5, single buffered']
    #allocation9 [shape = 's32[1]{0}', space=sflag, size = 0x4, scoped, tag = 'scoped memory for tpu_custom_call.1']
    #allocation10 [shape = 'u8[32768]{0}', space=vmem, size = 0x8000, scoped, tag = 'input window, operand 7, single buffered']
    #allocation11 [shape = 'u8[4096]{0}', space=vmem, size = 0x1000, scoped, tag = 'output window, operand 0, single buffered']
    %14 = vsyncpa [#allocation3], 0
    %15 = vsyncpa [#allocation6], 0
    %16 = vsyncpa [#allocation9], 0
    %17 = vsyncpa [#allocation4], 0
    // Predicated region
    $region2: #{tpu_custom_call.1} parent=1 // pred_check
      _
    $region3: #{tpu_custom_call.1} parent=1 // pred_check_branch
      %19 = sbr.rel (0) target = $region5
    $region4: #{tpu_custom_call.1} parent=1 // pred_region
      %s21 = ssub.s32 1792, 1792
      %22 = vsyncadd [#allocation3], %s21
      %s23 = sshll.u32 [#allocation2], 4
      %s24 = int_to_ptr.vmem [resolvable:$true] %s23
      %29 = dma.hbm_to_vmem [thread:$0]  %s0, 1792, %s24, [#allocation3], 896, 896, 56
    $region5: #{tpu_custom_call.1} parent=1 // pred_fallthru
      _
    // Predicated region
    $region6: #{tpu_custom_call.1} parent=1 // pred_check
      _
    $region7: #{tpu_custom_call.1} parent=1 // pred_check_branch
      %31 = sbr.rel (0) target = $region9
    $region8: #{tpu_custom_call.1} parent=1 // pred_region
      %s33 = ssub.s32 12544, 12544
      %34 = vsyncadd [#allocation6], %s33
      %s35 = sshll.u32 [#allocation5], 4
      %s36 = int_to_ptr.vmem [resolvable:$true] %s35
      %41 = dma.hbm_to_vmem [thread:$0]  %s1, 12544, %s36, [#allocation6], 128, 128, 8
    $region9: #{tpu_custom_call.1} parent=1 // pred_fallthru
      _
    // Predicated region
    $region10: #{tpu_custom_call.1} parent=1 // pred_check
      _
    $region11: #{tpu_custom_call.1} parent=1 // pred_check_branch
      %43 = sbr.rel (0) target = $region13
    $region12: #{tpu_custom_call.1} parent=1 // pred_region
      _
    $region13: #{tpu_custom_call.1} parent=1 // pred_fallthru
      _
    // Predicated region
    $region14: #{tpu_custom_call.1} parent=1 // pred_check
      _
    $region15: #{tpu_custom_call.1} parent=1 // pred_check_branch
      %45 = sbr.rel (0) target = $region17
    $region16: #{tpu_custom_call.1} parent=1 // pred_region
      %s47 = ssub.s32 2048, 2048
      %48 = vsyncadd [#allocation6], %s47
      %s49 = sshll.u32 [#allocation7], 4
      %s50 = int_to_ptr.vmem [resolvable:$true] %s49
      %55 = dma.hbm_to_vmem [thread:$0]  %s3, 2048, %s50, [#allocation6], 64, 64, 4
    $region17: #{tpu_custom_call.1} parent=1 // pred_fallthru
      _
    // Predicated region
    $region18: #{tpu_custom_call.1} parent=1 // pred_check
      _
    $region19: #{tpu_custom_call.1} parent=1 // pred_check_branch
      %57 = sbr.rel (0) target = $region21
    $region20: #{tpu_custom_call.1} parent=1 // pred_region
      _
    $region21: #{tpu_custom_call.1} parent=1 // pred_fallthru
      _
    // Predicated region
    $region22: #{tpu_custom_call.1} parent=1 // pred_check
      _
    $region23: #{tpu_custom_call.1} parent=1 // pred_check_branch
      %59 = sbr.rel (0) target = $region25
    $region24: #{tpu_custom_call.1} parent=1 // pred_region
      %s61 = ssub.s32 1024, 1024
      %62 = vsyncadd [#allocation9], %s61
      %s63 = sshll.u32 [#allocation8], 4
      %s64 = int_to_ptr.vmem [resolvable:$true] %s63
      %69 = dma.hbm_to_vmem [thread:$0]  %s5, 1024, %s64, [#allocation9], 64, 64, 4
    $region25: #{tpu_custom_call.1} parent=1 // pred_fallthru
      _
    // Predicated region
    $region26: #{tpu_custom_call.1} parent=1 // pred_check
      _
    $region27: #{tpu_custom_call.1} parent=1 // pred_check_branch
      %71 = sbr.rel (0) target = $region29
    $region28: #{tpu_custom_call.1} parent=1 // pred_region
      _
    $region29: #{tpu_custom_call.1} parent=1 // pred_fallthru
      _
    // Predicated region
    $region30: #{tpu_custom_call.1} parent=1 // pred_check
      _
    $region31: #{tpu_custom_call.1} parent=1 // pred_check_branch
      %73 = sbr.rel (0) target = $region33
    $region32: #{tpu_custom_call.1} parent=1 // pred_region
      %s75 = ssub.s32 1024, 1024
      %76 = vsyncadd [#allocation9], %s75
      %s77 = sshll.u32 [#allocation10], 4
      %s78 = int_to_ptr.vmem [resolvable:$true] %s77
      %83 = dma.hbm_to_vmem [thread:$0]  %s7, 1024, %s78, [#allocation9], 64, 64, 4
    $region33: #{tpu_custom_call.1} parent=1 // pred_fallthru
      _
    // Predicated region
    $region34: #{tpu_custom_call.1} parent=1 // pred_check
      _
    $region35: #{tpu_custom_call.1} parent=1 // pred_check_branch
      %85 = sbr.rel (0) target = $region37
    $region36: #{tpu_custom_call.1} parent=1 // pred_region
      _
    $region37: #{tpu_custom_call.1} parent=1 // pred_fallthru
      _
    // Predicated region
    $region38: #{tpu_custom_call.1} parent=1 // pred_check
      _
    $region39: #{tpu_custom_call.1} parent=1 // pred_check_branch
      %87 = sbr.rel (0) target = $region41
    $region40: #{tpu_custom_call.1} parent=1 // pred_region
      %88 = dma.done [#allocation3], 1792
    $region41: #{tpu_custom_call.1} parent=1 // pred_fallthru
      _
    // Predicated region
    $region42: #{tpu_custom_call.1} parent=1 // pred_check
      _
    $region43: #{tpu_custom_call.1} parent=1 // pred_check_branch
      %90 = sbr.rel (0) target = $region45
    $region44: #{tpu_custom_call.1} parent=1 // pred_region
      %91 = dma.done [#allocation6], 12544
    $region45: #{tpu_custom_call.1} parent=1 // pred_fallthru
      _
    // Predicated region
    $region46: #{tpu_custom_call.1} parent=1 // pred_check
      _
    $region47: #{tpu_custom_call.1} parent=1 // pred_check_branch
      %93 = sbr.rel (0) target = $region49
    $region48: #{tpu_custom_call.1} parent=1 // pred_region
      %94 = dma.done [#allocation6], 2048
    $region49: #{tpu_custom_call.1} parent=1 // pred_fallthru
      _
    // Predicated region
    $region50: #{tpu_custom_call.1} parent=1 // pred_check
      _
    $region51: #{tpu_custom_call.1} parent=1 // pred_check_branch
      %96 = sbr.rel (0) target = $region53
    $region52: #{tpu_custom_call.1} parent=1 // pred_region
      %97 = dma.done [#allocation9], 1024
    $region53: #{tpu_custom_call.1} parent=1 // pred_fallthru
      _
    // Predicated region
    $region54: #{tpu_custom_call.1} parent=1 // pred_check
      _
    $region55: #{tpu_custom_call.1} parent=1 // pred_check_branch
      %99 = sbr.rel (0) target = $region57
    $region56: #{tpu_custom_call.1} parent=1 // pred_region
      %100 = dma.done [#allocation9], 1024
    $region57: #{tpu_custom_call.1} parent=1 // pred_fallthru
      _
    %v102 = vld [vmem:[#allocation2] sm:$0xff]
    %v103 = vld [vmem:[#allocation2 + $0x8] sm:$0xff]
    %v104 = vld [vmem:[#allocation2 + $0x10] sm:$0xff]
    %v105 = vld [vmem:[#allocation2 + $0x18] sm:$0xff]
    %v106 = vld [vmem:[#allocation2 + $0x20] sm:$0xff]
    %v107 = vld [vmem:[#allocation2 + $0x28] sm:$0xff]
    %v108 = vld [vmem:[#allocation2 + $0x30] sm:$0xff]
    %v109 = vld [vmem:[#allocation2 + $0x38] sm:$0xff]
    %v110 = vld [vmem:[#allocation2 + $0x40] sm:$0xff]
    %v111 = vld [vmem:[#allocation2 + $0x48] sm:$0xff]
    %v112 = vld [vmem:[#allocation2 + $0x50] sm:$0xff]
    %v113 = vld [vmem:[#allocation2 + $0x58] sm:$0xff]
    %v114 = vld [vmem:[#allocation2 + $0x60] sm:$0xff]
    %v115 = vld [vmem:[#allocation2 + $0x68] sm:$0xff]
    %v116 = vpack.c.bf16 %v109, %v102
    %v117 = vpack.c.bf16 %v110, %v103
    %v118 = vpack.c.bf16 %v111, %v104
    %v119 = vpack.c.bf16 %v112, %v105
    %v120 = vpack.c.bf16 %v113, %v106
    %v121 = vpack.c.bf16 %v114, %v107
    %v122 = vpack.c.bf16 %v115, %v108
    %v123 = vld [vmem:[#allocation5] sm:$0xff]
    %v124 = vld [vmem:[#allocation5 + $0x8] sm:$0xff]
    %v125 = vld [vmem:[#allocation5 + $0x10] sm:$0xff]
    %v126 = vld [vmem:[#allocation5 + $0x18] sm:$0xff]
    %v127 = vld [vmem:[#allocation5 + $0x20] sm:$0xff]
    %v128 = vld [vmem:[#allocation5 + $0x28] sm:$0xff]
    %v129 = vld [vmem:[#allocation5 + $0x30] sm:$0xff]
    %v130 = vld [vmem:[#allocation5 + $0x38] sm:$0xff]
    %v131 = vld [vmem:[#allocation5 + $0x40] sm:$0xff]
    %v132 = vld [vmem:[#allocation5 + $0x48] sm:$0xff]
    %v133 = vld [vmem:[#allocation5 + $0x50] sm:$0xff]
    %v134 = vld [vmem:[#allocation5 + $0x58] sm:$0xff]
    %v135 = vld [vmem:[#allocation5 + $0x60] sm:$0xff]
    %v136 = vld [vmem:[#allocation5 + $0x68] sm:$0xff]
    %v137 = vld [vmem:[#allocation5 + $0x70] sm:$0xff]
    %v138 = vld [vmem:[#allocation5 + $0x78] sm:$0xff]
    %v139 = vld [vmem:[#allocation5 + $0x80] sm:$0xff]
    %v140 = vld [vmem:[#allocation5 + $0x88] sm:$0xff]
    %v141 = vld [vmem:[#allocation5 + $0x90] sm:$0xff]
    %v142 = vld [vmem:[#allocation5 + $0x98] sm:$0xff]
    %v143 = vld [vmem:[#allocation5 + $0xa0] sm:$0xff]
    %v144 = vld [vmem:[#allocation5 + $0xa8] sm:$0xff]
    %v145 = vld [vmem:[#allocation5 + $0xb0] sm:$0xff]
    %v146 = vld [vmem:[#allocation5 + $0xb8] sm:$0xff]
    %v147 = vld [vmem:[#allocation5 + $0xc0] sm:$0xff]
    %v148 = vld [vmem:[#allocation5 + $0xc8] sm:$0xff]
    %v149 = vld [vmem:[#allocation5 + $0xd0] sm:$0xff]
    %v150 = vld [vmem:[#allocation5 + $0xd8] sm:$0xff]
    %v151 = vld [vmem:[#allocation5 + $0xe0] sm:$0xff]
    %v152 = vld [vmem:[#allocation5 + $0xe8] sm:$0xff]
    %v153 = vld [vmem:[#allocation5 + $0xf0] sm:$0xff]
    %v154 = vld [vmem:[#allocation5 + $0xf8] sm:$0xff]
    %v155 = vld [vmem:[#allocation5 + $0x100] sm:$0xff]
    %v156 = vld [vmem:[#allocation5 + $0x108] sm:$0xff]
    %v157 = vld [vmem:[#allocation5 + $0x110] sm:$0xff]
    %v158 = vld [vmem:[#allocation5 + $0x118] sm:$0xff]
    %v159 = vld [vmem:[#allocation5 + $0x120] sm:$0xff]
    %v160 = vld [vmem:[#allocation5 + $0x128] sm:$0xff]
    %v161 = vld [vmem:[#allocation5 + $0x130] sm:$0xff]
    %v162 = vld [vmem:[#allocation5 + $0x138] sm:$0xff]
    %v163 = vld [vmem:[#allocation5 + $0x140] sm:$0xff]
    %v164 = vld [vmem:[#allocation5 + $0x148] sm:$0xff]
    %v165 = vld [vmem:[#allocation5 + $0x150] sm:$0xff]
    %v166 = vld [vmem:[#allocation5 + $0x158] sm:$0xff]
    %v167 = vld [vmem:[#allocation5 + $0x160] sm:$0xff]
    %v168 = vld [vmem:[#allocation5 + $0x168] sm:$0xff]
    %v169 = vld [vmem:[#allocation5 + $0x170] sm:$0xff]
    %v170 = vld [vmem:[#allocation5 + $0x178] sm:$0xff]
    %v171 = vld [vmem:[#allocation5 + $0x180] sm:$0xff]
    %v172 = vld [vmem:[#allocation5 + $0x188] sm:$0xff]
    %v173 = vld [vmem:[#allocation5 + $0x190] sm:$0xff]
    %v174 = vld [vmem:[#allocation5 + $0x198] sm:$0xff]
    %v175 = vld [vmem:[#allocation5 + $0x1a0] sm:$0xff]
    %v176 = vld [vmem:[#allocation5 + $0x1a8] sm:$0xff]
    %v177 = vld [vmem:[#allocation5 + $0x1b0] sm:$0xff]
    %v178 = vld [vmem:[#allocation5 + $0x1b8] sm:$0xff]
    %v179 = vld [vmem:[#allocation5 + $0x1c0] sm:$0xff]
    %v180 = vld [vmem:[#allocation5 + $0x1c8] sm:$0xff]
    %v181 = vld [vmem:[#allocation5 + $0x1d0] sm:$0xff]
    %v182 = vld [vmem:[#allocation5 + $0x1d8] sm:$0xff]
    %v183 = vld [vmem:[#allocation5 + $0x1e0] sm:$0xff]
    %v184 = vld [vmem:[#allocation5 + $0x1e8] sm:$0xff]
    %v185 = vld [vmem:[#allocation5 + $0x1f0] sm:$0xff]
    %v186 = vld [vmem:[#allocation5 + $0x1f8] sm:$0xff]
    %v187 = vld [vmem:[#allocation5 + $0x200] sm:$0xff]
    %v188 = vld [vmem:[#allocation5 + $0x208] sm:$0xff]
    %v189 = vld [vmem:[#allocation5 + $0x210] sm:$0xff]
    %v190 = vld [vmem:[#allocation5 + $0x218] sm:$0xff]
    %v191 = vld [vmem:[#allocation5 + $0x220] sm:$0xff]
    %v192 = vld [vmem:[#allocation5 + $0x228] sm:$0xff]
    %v193 = vld [vmem:[#allocation5 + $0x230] sm:$0xff]
    %v194 = vld [vmem:[#allocation5 + $0x238] sm:$0xff]
    %v195 = vld [vmem:[#allocation5 + $0x240] sm:$0xff]
    %v196 = vld [vmem:[#allocation5 + $0x248] sm:$0xff]
    %v197 = vld [vmem:[#allocation5 + $0x250] sm:$0xff]
    %v198 = vld [vmem:[#allocation5 + $0x258] sm:$0xff]
    %v199 = vld [vmem:[#allocation5 + $0x260] sm:$0xff]
    %v200 = vld [vmem:[#allocation5 + $0x268] sm:$0xff]
    %v201 = vld [vmem:[#allocation5 + $0x270] sm:$0xff]
    %v202 = vld [vmem:[#allocation5 + $0x278] sm:$0xff]
    %v203 = vld [vmem:[#allocation5 + $0x280] sm:$0xff]
    %v204 = vld [vmem:[#allocation5 + $0x288] sm:$0xff]
    %v205 = vld [vmem:[#allocation5 + $0x290] sm:$0xff]
    %v206 = vld [vmem:[#allocation5 + $0x298] sm:$0xff]
    %v207 = vld [vmem:[#allocation5 + $0x2a0] sm:$0xff]
    %v208 = vld [vmem:[#allocation5 + $0x2a8] sm:$0xff]
    %v209 = vld [vmem:[#allocation5 + $0x2b0] sm:$0xff]
    %v210 = vld [vmem:[#allocation5 + $0x2b8] sm:$0xff]
    %v211 = vld [vmem:[#allocation5 + $0x2c0] sm:$0xff]
    %v212 = vld [vmem:[#allocation5 + $0x2c8] sm:$0xff]
    %v213 = vld [vmem:[#allocation5 + $0x2d0] sm:$0xff]
    %v214 = vld [vmem:[#allocation5 + $0x2d8] sm:$0xff]
    %v215 = vld [vmem:[#allocation5 + $0x2e0] sm:$0xff]
    %v216 = vld [vmem:[#allocation5 + $0x2e8] sm:$0xff]
    %v217 = vld [vmem:[#allocation5 + $0x2f0] sm:$0xff]
    %v218 = vld [vmem:[#allocation5 + $0x2f8] sm:$0xff]
    %v219 = vld [vmem:[#allocation5 + $0x300] sm:$0xff]
    %v220 = vld [vmem:[#allocation5 + $0x308] sm:$0xff]
    %v221 = vld [vmem:[%s2] sm:$0x3]
    %v223 = vlaneseq
    %v224 = vshrl.u32 %v223, 7
    %v225 = vsub.s32 0, %v224
    %v226 = vrot.slane %v221, %v225
    %v227 = vlaneseq
    %v228 = vshrl.u32 %v227, 7
    %v229 = vsub.s32 1, %v228
    %v230 = vrot.slane %v221, %v229
    %v331 = vunpack.c.l.b16 %v123
    %v332 = vunpack.c.h.b16 %v123
    %v333 = vunpack.c.l.b16 %v124
    %v334 = vunpack.c.h.b16 %v124
    %v335 = vunpack.c.l.b16 %v125
    %v336 = vunpack.c.h.b16 %v125
    %v337 = vunpack.c.l.b16 %v126
    %v338 = vunpack.c.h.b16 %v126
    %v339 = vunpack.c.l.b16 %v127
    %v340 = vunpack.c.h.b16 %v127
    %v341 = vunpack.c.l.b16 %v128
    %v342 = vunpack.c.h.b16 %v128
    %v343 = vunpack.c.l.b16 %v129
    %v344 = vunpack.c.h.b16 %v129
    %v345 = vunpack.c.l.b16 %v130
    %v346 = vunpack.c.h.b16 %v130
    %v347 = vunpack.c.l.b16 %v131
    %v348 = vunpack.c.h.b16 %v131
    %v349 = vunpack.c.l.b16 %v132
    %v350 = vunpack.c.h.b16 %v132
    %v351 = vunpack.c.l.b16 %v133
    %v352 = vunpack.c.h.b16 %v133
    %v353 = vunpack.c.l.b16 %v134
    %v354 = vunpack.c.h.b16 %v134
    %v355 = vunpack.c.l.b16 %v135
    %v356 = vunpack.c.h.b16 %v135
    %v357 = vunpack.c.l.b16 %v136
    %v358 = vunpack.c.h.b16 %v136
    %v359 = vunpack.c.l.b16 %v137
    %v360 = vunpack.c.h.b16 %v137
    %v361 = vunpack.c.l.b16 %v138
    %v362 = vunpack.c.h.b16 %v138
    %v363 = vunpack.c.l.b16 %v139
    %v364 = vunpack.c.h.b16 %v139
    %v365 = vunpack.c.l.b16 %v140
    %v366 = vunpack.c.h.b16 %v140
    %v367 = vunpack.c.l.b16 %v141
    %v368 = vunpack.c.h.b16 %v141
    %v369 = vunpack.c.l.b16 %v142
    %v370 = vunpack.c.h.b16 %v142
    %v371 = vunpack.c.l.b16 %v143
    %v372 = vunpack.c.h.b16 %v143
    %v373 = vunpack.c.l.b16 %v144
    %v374 = vunpack.c.h.b16 %v144
    %v375 = vunpack.c.l.b16 %v145
    %v376 = vunpack.c.h.b16 %v145
    %v377 = vunpack.c.l.b16 %v146
    %v378 = vunpack.c.h.b16 %v146
    %v379 = vunpack.c.l.b16 %v147
    %v380 = vunpack.c.h.b16 %v147
    %v381 = vunpack.c.l.b16 %v148
    %v382 = vunpack.c.h.b16 %v148
    %v383 = vunpack.c.l.b16 %v149
    %v384 = vunpack.c.h.b16 %v149
    %v385 = vunpack.c.l.b16 %v150
    %v386 = vunpack.c.h.b16 %v150
    %v387 = vunpack.c.l.b16 %v151
    %v388 = vunpack.c.h.b16 %v151
    %v389 = vunpack.c.l.b16 %v152
    %v390 = vunpack.c.h.b16 %v152
    %v391 = vunpack.c.l.b16 %v153
    %v392 = vunpack.c.h.b16 %v153
    %v393 = vunpack.c.l.b16 %v154
    %v394 = vunpack.c.h.b16 %v154
    %v395 = vunpack.c.l.b16 %v155
    %v396 = vunpack.c.h.b16 %v155
    %v397 = vunpack.c.l.b16 %v156
    %v398 = vunpack.c.h.b16 %v156
    %v399 = vunpack.c.l.b16 %v157
    %v400 = vunpack.c.h.b16 %v157
    %v401 = vunpack.c.l.b16 %v158
    %v402 = vunpack.c.h.b16 %v158
    %v403 = vunpack.c.l.b16 %v159
    %v404 = vunpack.c.h.b16 %v159
    %v405 = vunpack.c.l.b16 %v160
    %v406 = vunpack.c.h.b16 %v160
    %v407 = vunpack.c.l.b16 %v161
    %v408 = vunpack.c.h.b16 %v161
    %v409 = vunpack.c.l.b16 %v162
    %v410 = vunpack.c.h.b16 %v162
    %v411 = vunpack.c.l.b16 %v163
    %v412 = vunpack.c.h.b16 %v163
    %v413 = vunpack.c.l.b16 %v164
    %v414 = vunpack.c.h.b16 %v164
    %v415 = vunpack.c.l.b16 %v165
    %v416 = vunpack.c.h.b16 %v165
    %v417 = vunpack.c.l.b16 %v166
    %v418 = vunpack.c.h.b16 %v166
    %v419 = vunpack.c.l.b16 %v167
    %v420 = vunpack.c.h.b16 %v167
    %v421 = vunpack.c.l.b16 %v168
    %v422 = vunpack.c.h.b16 %v168
    %v423 = vunpack.c.l.b16 %v169
    %v424 = vunpack.c.h.b16 %v169
    %v425 = vunpack.c.l.b16 %v170
    %v426 = vunpack.c.h.b16 %v170
    %v427 = vunpack.c.l.b16 %v171
    %v428 = vunpack.c.h.b16 %v171
    %v429 = vunpack.c.l.b16 %v172
    %v430 = vunpack.c.h.b16 %v172
    %v431 = vunpack.c.l.b16 %v173
    %v432 = vunpack.c.h.b16 %v173
    %v433 = vunpack.c.l.b16 %v174
    %v434 = vunpack.c.h.b16 %v174
    %v435 = vunpack.c.l.b16 %v175
    %v436 = vunpack.c.h.b16 %v175
    %v437 = vunpack.c.l.b16 %v176
    %v438 = vunpack.c.h.b16 %v176
    %v439 = vunpack.c.l.b16 %v177
    %v440 = vunpack.c.h.b16 %v177
    %v441 = vunpack.c.l.b16 %v178
    %v442 = vunpack.c.h.b16 %v178
    %v443 = vunpack.c.l.b16 %v179
    %v444 = vunpack.c.h.b16 %v179
    %v445 = vunpack.c.l.b16 %v180
    %v446 = vunpack.c.h.b16 %v180
    %v447 = vunpack.c.l.b16 %v181
    %v448 = vunpack.c.h.b16 %v181
    %v449 = vunpack.c.l.b16 %v182
    %v450 = vunpack.c.h.b16 %v182
    %v451 = vunpack.c.l.b16 %v183
    %v452 = vunpack.c.h.b16 %v183
    %v453 = vunpack.c.l.b16 %v184
    %v454 = vunpack.c.h.b16 %v184
    %v455 = vunpack.c.l.b16 %v185
    %v456 = vunpack.c.h.b16 %v185
    %v457 = vunpack.c.l.b16 %v186
    %v458 = vunpack.c.h.b16 %v186
    %v459 = vunpack.c.l.b16 %v187
    %v460 = vunpack.c.h.b16 %v187
    %v461 = vunpack.c.l.b16 %v188
    %v462 = vunpack.c.h.b16 %v188
    %v463 = vunpack.c.l.b16 %v189
    %v464 = vunpack.c.h.b16 %v189
    %v465 = vunpack.c.l.b16 %v190
    %v466 = vunpack.c.h.b16 %v190
    %v467 = vunpack.c.l.b16 %v191
    %v468 = vunpack.c.h.b16 %v191
    %v469 = vunpack.c.l.b16 %v192
    %v470 = vunpack.c.h.b16 %v192
    %v471 = vunpack.c.l.b16 %v193
    %v472 = vunpack.c.h.b16 %v193
    %v473 = vunpack.c.l.b16 %v194
    %v474 = vunpack.c.h.b16 %v194
    %v475 = vunpack.c.l.b16 %v195
    %v476 = vunpack.c.h.b16 %v195
    %v477 = vunpack.c.l.b16 %v196
    %v478 = vunpack.c.h.b16 %v196
    %v479 = vunpack.c.l.b16 %v197
    %v480 = vunpack.c.h.b16 %v197
    %v481 = vunpack.c.l.b16 %v198
    %v482 = vunpack.c.h.b16 %v198
    %v483 = vunpack.c.l.b16 %v199
    %v484 = vunpack.c.h.b16 %v199
    %v485 = vunpack.c.l.b16 %v200
    %v486 = vunpack.c.h.b16 %v200
    %v487 = vunpack.c.l.b16 %v201
    %v488 = vunpack.c.h.b16 %v201
    %v489 = vunpack.c.l.b16 %v202
    %v490 = vunpack.c.h.b16 %v202
    %v491 = vunpack.c.l.b16 %v203
    %v492 = vunpack.c.h.b16 %v203
    %v493 = vunpack.c.l.b16 %v204
    %v494 = vunpack.c.h.b16 %v204
    %v495 = vunpack.c.l.b16 %v205
    %v496 = vunpack.c.h.b16 %v205
    %v497 = vunpack.c.l.b16 %v206
    %v498 = vunpack.c.h.b16 %v206
    %v499 = vunpack.c.l.b16 %v207
    %v500 = vunpack.c.h.b16 %v207
    %v501 = vunpack.c.l.b16 %v208
    %v502 = vunpack.c.h.b16 %v208
    %v503 = vunpack.c.l.b16 %v209
    %v504 = vunpack.c.h.b16 %v209
    %v505 = vunpack.c.l.b16 %v210
    %v506 = vunpack.c.h.b16 %v210
    %v507 = vunpack.c.l.b16 %v211
    %v508 = vunpack.c.h.b16 %v211
    %v509 = vunpack.c.l.b16 %v212
    %v510 = vunpack.c.h.b16 %v212
    %v511 = vunpack.c.l.b16 %v213
    %v512 = vunpack.c.h.b16 %v213
    %v513 = vunpack.c.l.b16 %v214
    %v514 = vunpack.c.h.b16 %v214
    %v515 = vunpack.c.l.b16 %v215
    %v516 = vunpack.c.h.b16 %v215
    %v517 = vunpack.c.l.b16 %v216
    %v518 = vunpack.c.h.b16 %v216
    %v519 = vunpack.c.l.b16 %v217
    %v520 = vunpack.c.h.b16 %v217
    %v521 = vunpack.c.l.b16 %v218
    %v522 = vunpack.c.h.b16 %v218
    %v523 = vunpack.c.l.b16 %v219
    %v524 = vunpack.c.h.b16 %v219
    %v525 = vunpack.c.l.b16 %v220
    %v526 = vunpack.c.h.b16 %v220
    %v527 = vpack.c.b16 %v333, %v331
    %v528 = vpack.c.b16 %v334, %v332
    %v529 = vpack.c.b16 %v337, %v335
    %v530 = vpack.c.b16 %v338, %v336
    %v531 = vpack.c.b16 %v341, %v339
    %v532 = vpack.c.b16 %v342, %v340
    %v533 = vpack.c.b16 %v345, %v343
    %v534 = vpack.c.b16 %v346, %v344
    %v535 = vpack.c.b16 %v349, %v347
    %v536 = vpack.c.b16 %v350, %v348
    %v537 = vpack.c.b16 %v353, %v351
    %v538 = vpack.c.b16 %v354, %v352
    %v539 = vpack.c.b16 %v357, %v355
    %v540 = vpack.c.b16 %v358, %v356
    %v541 = vpack.c.b16 %v361, %v359
    %v542 = vpack.c.b16 %v362, %v360
    %v543 = vpack.c.b16 %v365, %v363
    %v544 = vpack.c.b16 %v366, %v364
    %v545 = vpack.c.b16 %v369, %v367
    %v546 = vpack.c.b16 %v370, %v368
    %v547 = vpack.c.b16 %v373, %v371
    %v548 = vpack.c.b16 %v374, %v372
    %v549 = vpack.c.b16 %v377, %v375
    %v550 = vpack.c.b16 %v378, %v376
    %v551 = vpack.c.b16 %v381, %v379
    %v552 = vpack.c.b16 %v382, %v380
    %v553 = vpack.c.b16 %v385, %v383
    %v554 = vpack.c.b16 %v386, %v384
    %v555 = vpack.c.b16 %v389, %v387
    %v556 = vpack.c.b16 %v390, %v388
    %v557 = vpack.c.b16 %v393, %v391
    %v558 = vpack.c.b16 %v394, %v392
    %v559 = vpack.c.b16 %v397, %v395
    %v560 = vpack.c.b16 %v398, %v396
    %v561 = vpack.c.b16 %v401, %v399
    %v562 = vpack.c.b16 %v402, %v400
    %v563 = vpack.c.b16 %v405, %v403
    %v564 = vpack.c.b16 %v406, %v404
    %v565 = vpack.c.b16 %v409, %v407
    %v566 = vpack.c.b16 %v410, %v408
    %v567 = vpack.c.b16 %v413, %v411
    %v568 = vpack.c.b16 %v414, %v412
    %v569 = vpack.c.b16 %v417, %v415
    %v570 = vpack.c.b16 %v418, %v416
    %v571 = vpack.c.b16 %v421, %v419
    %v572 = vpack.c.b16 %v422, %v420
    %v573 = vpack.c.b16 %v425, %v423
    %v574 = vpack.c.b16 %v426, %v424
    %v575 = vpack.c.b16 %v429, %v427
    %v576 = vpack.c.b16 %v430, %v428
    %v577 = vpack.c.b16 %v433, %v431
    %v578 = vpack.c.b16 %v434, %v432
    %v579 = vpack.c.b16 %v437, %v435
    %v580 = vpack.c.b16 %v438, %v436
    %v581 = vpack.c.b16 %v441, %v439
    %v582 = vpack.c.b16 %v442, %v440
    %v583 = vpack.c.b16 %v445, %v443
    %v584 = vpack.c.b16 %v446, %v444
    %v585 = vpack.c.b16 %v449, %v447
    %v586 = vpack.c.b16 %v450, %v448
    %v587 = vpack.c.b16 %v453, %v451
    %v588 = vpack.c.b16 %v454, %v452
    %v589 = vpack.c.b16 %v457, %v455
    %v590 = vpack.c.b16 %v458, %v456
    %v591 = vpack.c.b16 %v461, %v459
    %v592 = vpack.c.b16 %v462, %v460
    %v593 = vpack.c.b16 %v465, %v463
    %v594 = vpack.c.b16 %v466, %v464
    %v595 = vpack.c.b16 %v469, %v467
    %v596 = vpack.c.b16 %v470, %v468
    %v597 = vpack.c.b16 %v473, %v471
    %v598 = vpack.c.b16 %v474, %v472
    %v599 = vpack.c.b16 %v477, %v475
    %v600 = vpack.c.b16 %v478, %v476
    %v601 = vpack.c.b16 %v481, %v479
    %v602 = vpack.c.b16 %v482, %v480
    %v603 = vpack.c.b16 %v485, %v483
    %v604 = vpack.c.b16 %v486, %v484
    %v605 = vpack.c.b16 %v489, %v487
    %v606 = vpack.c.b16 %v490, %v488
    %v607 = vpack.c.b16 %v493, %v491
    %v608 = vpack.c.b16 %v494, %v492
    %v609 = vpack.c.b16 %v497, %v495
    %v610 = vpack.c.b16 %v498, %v496
    %v611 = vpack.c.b16 %v501, %v499
    %v612 = vpack.c.b16 %v502, %v500
    %v613 = vpack.c.b16 %v505, %v503
    %v614 = vpack.c.b16 %v506, %v504
    %v615 = vpack.c.b16 %v509, %v507
    %v616 = vpack.c.b16 %v510, %v508
    %v617 = vpack.c.b16 %v513, %v511
    %v618 = vpack.c.b16 %v514, %v512
    %v619 = vpack.c.b16 %v517, %v515
    %v620 = vpack.c.b16 %v518, %v516
    %v621 = vpack.c.b16 %v521, %v519
    %v622 = vpack.c.b16 %v522, %v520
    %v623 = vpack.c.b16 %v525, %v523
    %v624 = vpack.c.b16 %v526, %v524
    %vm723 = vcmask 130048
    %v725 = vsel %vm723, %v122, 0
    %727 = vmatprep.subr.bf16.mxu0 %v528
    %728 = vmatpush1.bf16.msra.mxu0 %v527
    %729 = vmatprep.subr.bf16.mxu0 %v530
    %730 = vmatpush1.bf16.msra.mxu0 %v529
    %731 = vmatprep.subr.bf16.mxu0 %v532
    %732 = vmatpush1.bf16.msra.mxu0 %v531
    %733 = vmatprep.subr.bf16.mxu0 %v534
    %734 = vmatpush1.bf16.msra.mxu0 %v533
    %735 = vmatprep.subr.bf16.mxu0 %v536
    %736 = vmatpush1.bf16.msra.mxu0 %v535
    %737 = vmatprep.subr.bf16.mxu0 %v538
    %738 = vmatpush1.bf16.msra.mxu0 %v537
    %739 = vmatprep.subr.bf16.mxu0 %v540
    %740 = vmatpush1.bf16.msra.mxu0 %v539
    %741 = vmatprep.subr.bf16.mxu0 %v542
    %742 = vmatpush1.bf16.msra.mxu0 %v541
    %743 = vmatprep.subr.bf16.mxu0 %v544
    %744 = vmatpush1.bf16.msra.mxu0 %v543
    %745 = vmatprep.subr.bf16.mxu0 %v546
    %746 = vmatpush1.bf16.msra.mxu0 %v545
    %747 = vmatprep.subr.bf16.mxu0 %v548
    %748 = vmatpush1.bf16.msra.mxu0 %v547
    %749 = vmatprep.subr.bf16.mxu0 %v550
    %750 = vmatpush1.bf16.msra.mxu0 %v549
    %751 = vmatprep.subr.bf16.mxu0 %v552
    %752 = vmatpush1.bf16.msra.mxu0 %v551
    %753 = vmatprep.subr.bf16.mxu0 %v554
    %754 = vmatpush1.bf16.msra.mxu0 %v553
    %755 = vmatprep.subr.bf16.mxu0 %v556
    %756 = vmatpush1.bf16.msra.mxu0 %v555
    %757 = vmatprep.subr.bf16.mxu0 %v558
    %758 = vmatpush1.bf16.msra.mxu0 %v557
    %759 = vmatprep.mubr.bf16.mxu0 %v117
    %760 = vmatmul.mubr.bf16.gmra.mrb[0].mxu0 %v116
    %v761 = vpop.f32.mrb[0].mxu0
    %v762 = vadd.f32 %v226, %v761
    %v763 = vpop.f32.mrb[0].mxu0
    %v764 = vadd.f32 %v230, %v763
    %v765 = vpop.f32.mrb[0].mxu0
    %v766 = vadd.f32 %v226, %v765
    %v767 = vpop.f32.mrb[0].mxu0
    %v768 = vadd.f32 %v230, %v767
    %769 = vdwg.mxu0
    %770 = vmatprep.subr.bf16.mxu0 %v560
    %771 = vmatpush1.bf16.msra.mxu0 %v559
    %772 = vmatprep.subr.bf16.mxu0 %v562
    %773 = vmatpush1.bf16.msra.mxu0 %v561
    %774 = vmatprep.subr.bf16.mxu0 %v564
    %775 = vmatpush1.bf16.msra.mxu0 %v563
    %776 = vmatprep.subr.bf16.mxu0 %v566
    %777 = vmatpush1.bf16.msra.mxu0 %v565
    %778 = vmatprep.subr.bf16.mxu0 %v568
    %779 = vmatpush1.bf16.msra.mxu0 %v567
    %780 = vmatprep.subr.bf16.mxu0 %v570
    %781 = vmatpush1.bf16.msra.mxu0 %v569
    %782 = vmatprep.subr.bf16.mxu0 %v572
    %783 = vmatpush1.bf16.msra.mxu0 %v571
    %784 = vmatprep.subr.bf16.mxu0 %v574
    %785 = vmatpush1.bf16.msra.mxu0 %v573
    %786 = vmatprep.subr.bf16.mxu0 %v576
    %787 = vmatpush1.bf16.msra.mxu0 %v575
    %788 = vmatprep.subr.bf16.mxu0 %v578
    %789 = vmatpush1.bf16.msra.mxu0 %v577
    %790 = vmatprep.subr.bf16.mxu0 %v580
    %791 = vmatpush1.bf16.msra.mxu0 %v579
    %792 = vmatprep.subr.bf16.mxu0 %v582
    %793 = vmatpush1.bf16.msra.mxu0 %v581
    %794 = vmatprep.subr.bf16.mxu0 %v584
    %795 = vmatpush1.bf16.msra.mxu0 %v583
    %796 = vmatprep.subr.bf16.mxu0 %v586
    %797 = vmatpush1.bf16.msra.mxu0 %v585
    %798 = vmatprep.subr.bf16.mxu0 %v588
    %799 = vmatpush1.bf16.msra.mxu0 %v587
    %800 = vmatprep.subr.bf16.mxu0 %v590
    %801 = vmatpush1.bf16.msra.mxu0 %v589
    %802 = vmatprep.mubr.bf16.mxu0 %v119
    %803 = vmatmul.mubr.bf16.gmra.mrb[0].mxu0 %v118
    %v804 = vpop.f32.mrb[0].mxu0
    %v805 = vadd.f32 %v762, %v804
    %v806 = vpop.f32.mrb[0].mxu0
    %v807 = vadd.f32 %v764, %v806
    %v808 = vpop.f32.mrb[0].mxu0
    %v809 = vadd.f32 %v766, %v808
    %v810 = vpop.f32.mrb[0].mxu0
    %v811 = vadd.f32 %v768, %v810
    %812 = vdwg.mxu0
    %813 = vmatprep.subr.bf16.mxu0 %v592
    %814 = vmatpush1.bf16.msra.mxu0 %v591
    %815 = vmatprep.subr.bf16.mxu0 %v594
    %816 = vmatpush1.bf16.msra.mxu0 %v593
    %817 = vmatprep.subr.bf16.mxu0 %v596
    %818 = vmatpush1.bf16.msra.mxu0 %v595
    %819 = vmatprep.subr.bf16.mxu0 %v598
    %820 = vmatpush1.bf16.msra.mxu0 %v597
    %821 = vmatprep.subr.bf16.mxu0 %v600
    %822 = vmatpush1.bf16.msra.mxu0 %v599
    %823 = vmatprep.subr.bf16.mxu0 %v602
    %824 = vmatpush1.bf16.msra.mxu0 %v601
    %825 = vmatprep.subr.bf16.mxu0 %v604
    %826 = vmatpush1.bf16.msra.mxu0 %v603
    %827 = vmatprep.subr.bf16.mxu0 %v606
    %828 = vmatpush1.bf16.msra.mxu0 %v605
    %829 = vmatprep.subr.bf16.mxu0 %v608
    %830 = vmatpush1.bf16.msra.mxu0 %v607
    %831 = vmatprep.subr.bf16.mxu0 %v610
    %832 = vmatpush1.bf16.msra.mxu0 %v609
    %833 = vmatprep.subr.bf16.mxu0 %v612
    %834 = vmatpush1.bf16.msra.mxu0 %v611
    %835 = vmatprep.subr.bf16.mxu0 %v614
    %836 = vmatpush1.bf16.msra.mxu0 %v613
    %837 = vmatprep.subr.bf16.mxu0 %v616
    %838 = vmatpush1.bf16.msra.mxu0 %v615
    %839 = vmatprep.subr.bf16.mxu0 %v618
    %840 = vmatpush1.bf16.msra.mxu0 %v617
    %841 = vmatprep.subr.bf16.mxu0 %v620
    %842 = vmatpush1.bf16.msra.mxu0 %v619
    %843 = vmatprep.subr.bf16.mxu0 %v622
    %844 = vmatpush1.bf16.msra.mxu0 %v621
    %845 = vmatprep.mubr.bf16.mxu0 %v121
    %846 = vmatmul.mubr.bf16.gmra.mrb[0].mxu0 %v120
    %v847 = vpop.f32.mrb[0].mxu0
    %v848 = vadd.f32 %v805, %v847
    %v849 = vpop.f32.mrb[0].mxu0
    %v850 = vadd.f32 %v807, %v849
    %v851 = vpop.f32.mrb[0].mxu0
    %v852 = vadd.f32 %v809, %v851
    %v853 = vpop.f32.mrb[0].mxu0
    %v854 = vadd.f32 %v811, %v853
    %855 = vdwg.mxu0
    %856 = vmatprep.subr.bf16.mxu0 %v624
    %857 = vmatpush1.bf16.msra.mxu0 %v623
    %858 = vmatprep.subr.bf16.mxu0 0
    %859 = vmatpush1.bf16.msra.mxu0 0
    %860 = vmatprep.subr.bf16.mxu0 0
    %861 = vmatpush1.bf16.msra.mxu0 0
    %862 = vmatprep.subr.bf16.mxu0 0
    %863 = vmatpush1.bf16.msra.mxu0 0
    %864 = vmatprep.subr.bf16.mxu0 0
    %865 = vmatpush1.bf16.msra.mxu0 0
    %866 = vmatprep.subr.bf16.mxu0 0
    %867 = vmatpush1.bf16.msra.mxu0 0
    %868 = vmatprep.subr.bf16.mxu0 0
    %869 = vmatpush1.bf16.msra.mxu0 0
    %870 = vmatprep.subr.bf16.mxu0 0
    %871 = vmatpush1.bf16.msra.mxu0 0
    %872 = vmatprep.subr.bf16.mxu0 0
    %873 = vmatpush1.bf16.msra.mxu0 0
    %874 = vmatprep.subr.bf16.mxu0 0
    %875 = vmatpush1.bf16.msra.mxu0 0
    %876 = vmatprep.subr.bf16.mxu0 0
    %877 = vmatpush1.bf16.msra.mxu0 0
    %878 = vmatprep.subr.bf16.mxu0 0
    %879 = vmatpush1.bf16.msra.mxu0 0
    %880 = vmatprep.subr.bf16.mxu0 0
    %881 = vmatpush1.bf16.msra.mxu0 0
    %882 = vmatprep.subr.bf16.mxu0 0
    %883 = vmatpush1.bf16.msra.mxu0 0
    %884 = vmatprep.subr.bf16.mxu0 0
    %885 = vmatpush1.bf16.msra.mxu0 0
    %886 = vmatprep.subr.bf16.mxu0 0
    %887 = vmatpush1.bf16.msra.mxu0 0
    %888 = vmatprep.mubr.bf16.mxu0 0
    %889 = vmatmul.mubr.bf16.gmra.mrb[0].mxu0 %v725
    %v890 = vpop.f32.mrb[0].mxu0
    %v891 = vadd.f32 %v848, %v890
    %v892 = vpop.f32.mrb[0].mxu0
    %v893 = vadd.f32 %v850, %v892
    %v894 = vpop.f32.mrb[0].mxu0
    %v895 = vadd.f32 %v852, %v894
    %v896 = vpop.f32.mrb[0].mxu0
    %v897 = vadd.f32 %v854, %v896
    %898 = vdwg.mxu0
    %v899 = vmax.f32 %v891, 0.0
    %v900 = vmax.f32 %v893, 0.0
    %v901 = vmax.f32 %v895, 0.0
    %v902 = vmax.f32 %v897, 0.0
    %v903 = vpack.c.bf16 %v901, %v899
    %v904 = vpack.c.bf16 %v902, %v900
    %v905 = vld [vmem:[#allocation7] sm:$0xf]
    %v906 = vld [vmem:[#allocation7 + $0x4] sm:$0xf]
    %v907 = vld [vmem:[#allocation7 + $0x8] sm:$0xf]
    %v908 = vld [vmem:[#allocation7 + $0xc] sm:$0xf]
    %v909 = vld [vmem:[#allocation7 + $0x10] sm:$0xf]
    %v910 = vld [vmem:[#allocation7 + $0x14] sm:$0xf]
    %v911 = vld [vmem:[#allocation7 + $0x18] sm:$0xf]
    %v912 = vld [vmem:[#allocation7 + $0x1c] sm:$0xf]
    %v913 = vld [vmem:[#allocation7 + $0x20] sm:$0xf]
    %v914 = vld [vmem:[#allocation7 + $0x24] sm:$0xf]
    %v915 = vld [vmem:[#allocation7 + $0x28] sm:$0xf]
    %v916 = vld [vmem:[#allocation7 + $0x2c] sm:$0xf]
    %v917 = vld [vmem:[#allocation7 + $0x30] sm:$0xf]
    %v918 = vld [vmem:[#allocation7 + $0x34] sm:$0xf]
    %v919 = vld [vmem:[#allocation7 + $0x38] sm:$0xf]
    %v920 = vld [vmem:[#allocation7 + $0x3c] sm:$0xf]
    %v921 = vld [vmem:[#allocation7 + $0x40] sm:$0xf]
    %v922 = vld [vmem:[#allocation7 + $0x44] sm:$0xf]
    %v923 = vld [vmem:[#allocation7 + $0x48] sm:$0xf]
    %v924 = vld [vmem:[#allocation7 + $0x4c] sm:$0xf]
    %v925 = vld [vmem:[#allocation7 + $0x50] sm:$0xf]
    %v926 = vld [vmem:[#allocation7 + $0x54] sm:$0xf]
    %v927 = vld [vmem:[#allocation7 + $0x58] sm:$0xf]
    %v928 = vld [vmem:[#allocation7 + $0x5c] sm:$0xf]
    %v929 = vld [vmem:[#allocation7 + $0x60] sm:$0xf]
    %v930 = vld [vmem:[#allocation7 + $0x64] sm:$0xf]
    %v931 = vld [vmem:[#allocation7 + $0x68] sm:$0xf]
    %v932 = vld [vmem:[#allocation7 + $0x6c] sm:$0xf]
    %v933 = vld [vmem:[#allocation7 + $0x70] sm:$0xf]
    %v934 = vld [vmem:[#allocation7 + $0x74] sm:$0xf]
    %v935 = vld [vmem:[#allocation7 + $0x78] sm:$0xf]
    %v936 = vld [vmem:[#allocation7 + $0x7c] sm:$0xf]
    %v937 = vld [vmem:[%s4] sm:$0x1]
    %v939 = vlaneseq
    %v940 = vshrl.u32 %v939, 7
    %v941 = vsub.s32 0, %v940
    %v942 = vrot.slane %v937, %v941
    %v976 = vunpack.c.l.b16 %v905
    %v977 = vunpack.c.l.b16 %v906
    %v978 = vunpack.c.l.b16 %v907
    %v979 = vunpack.c.l.b16 %v908
    %v980 = vunpack.c.l.b16 %v909
    %v981 = vunpack.c.l.b16 %v910
    %v982 = vunpack.c.l.b16 %v911
    %v983 = vunpack.c.l.b16 %v912
    %v984 = vunpack.c.l.b16 %v913
    %v985 = vunpack.c.l.b16 %v914
    %v986 = vunpack.c.l.b16 %v915
    %v987 = vunpack.c.l.b16 %v916
    %v988 = vunpack.c.l.b16 %v917
    %v989 = vunpack.c.l.b16 %v918
    %v990 = vunpack.c.l.b16 %v919
    %v991 = vunpack.c.l.b16 %v920
    %v992 = vunpack.c.l.b16 %v921
    %v993 = vunpack.c.l.b16 %v922
    %v994 = vunpack.c.l.b16 %v923
    %v995 = vunpack.c.l.b16 %v924
    %v996 = vunpack.c.l.b16 %v925
    %v997 = vunpack.c.l.b16 %v926
    %v998 = vunpack.c.l.b16 %v927
    %v999 = vunpack.c.l.b16 %v928
    %v1000 = vunpack.c.l.b16 %v929
    %v1001 = vunpack.c.l.b16 %v930
    %v1002 = vunpack.c.l.b16 %v931
    %v1003 = vunpack.c.l.b16 %v932
    %v1004 = vunpack.c.l.b16 %v933
    %v1005 = vunpack.c.l.b16 %v934
    %v1006 = vunpack.c.l.b16 %v935
    %v1007 = vunpack.c.l.b16 %v936
    %v1008 = vpack.c.b16 %v977, %v976
    %v1009 = vpack.c.b16 %v979, %v978
    %v1010 = vpack.c.b16 %v981, %v980
    %v1011 = vpack.c.b16 %v983, %v982
    %v1012 = vpack.c.b16 %v985, %v984
    %v1013 = vpack.c.b16 %v987, %v986
    %v1014 = vpack.c.b16 %v989, %v988
    %v1015 = vpack.c.b16 %v991, %v990
    %v1016 = vpack.c.b16 %v993, %v992
    %v1017 = vpack.c.b16 %v995, %v994
    %v1018 = vpack.c.b16 %v997, %v996
    %v1019 = vpack.c.b16 %v999, %v998
    %v1020 = vpack.c.b16 %v1001, %v1000
    %v1021 = vpack.c.b16 %v1003, %v1002
    %v1022 = vpack.c.b16 %v1005, %v1004
    %v1023 = vpack.c.b16 %v1007, %v1006
    %1040 = vmatprep.subr.bf16.mxu0 0
    %1041 = vmatpush1.bf16.msra.mxu0 %v1008
    %1042 = vmatprep.subr.bf16.mxu0 0
    %1043 = vmatpush1.bf16.msra.mxu0 %v1009
    %1044 = vmatprep.subr.bf16.mxu0 0
    %1045 = vmatpush1.bf16.msra.mxu0 %v1010
    %1046 = vmatprep.subr.bf16.mxu0 0
    %1047 = vmatpush1.bf16.msra.mxu0 %v1011
    %1048 = vmatprep.subr.bf16.mxu0 0
    %1049 = vmatpush1.bf16.msra.mxu0 %v1012
    %1050 = vmatprep.subr.bf16.mxu0 0
    %1051 = vmatpush1.bf16.msra.mxu0 %v1013
    %1052 = vmatprep.subr.bf16.mxu0 0
    %1053 = vmatpush1.bf16.msra.mxu0 %v1014
    %1054 = vmatprep.subr.bf16.mxu0 0
    %1055 = vmatpush1.bf16.msra.mxu0 %v1015
    %1056 = vmatprep.subr.bf16.mxu0 0
    %1057 = vmatpush1.bf16.msra.mxu0 %v1016
    %1058 = vmatprep.subr.bf16.mxu0 0
    %1059 = vmatpush1.bf16.msra.mxu0 %v1017
    %1060 = vmatprep.subr.bf16.mxu0 0
    %1061 = vmatpush1.bf16.msra.mxu0 %v1018
    %1062 = vmatprep.subr.bf16.mxu0 0
    %1063 = vmatpush1.bf16.msra.mxu0 %v1019
    %1064 = vmatprep.subr.bf16.mxu0 0
    %1065 = vmatpush1.bf16.msra.mxu0 %v1020
    %1066 = vmatprep.subr.bf16.mxu0 0
    %1067 = vmatpush1.bf16.msra.mxu0 %v1021
    %1068 = vmatprep.subr.bf16.mxu0 0
    %1069 = vmatpush1.bf16.msra.mxu0 %v1022
    %1070 = vmatprep.subr.bf16.mxu0 0
    %1071 = vmatpush1.bf16.msra.mxu0 %v1023
    %1072 = vmatprep.mubr.bf16.mxu0 %v904
    %1073 = vmatmul.mubr.bf16.gmra.mrb[0].mxu0 %v903
    %v1074 = vpop.f32.mrb[0].mxu0
    %v1075 = vadd.f32 %v942, %v1074
    %v1076 = vpop.f32.mrb[0].mxu0
    %v1077 = vpop.f32.mrb[0].mxu0
    %v1078 = vadd.f32 %v942, %v1077
    %v1079 = vpop.f32.mrb[0].mxu0
    %1080 = vdwg.mxu0
    %v1081 = vmax.f32 %v1075, 0.0
    %v1082 = vmax.f32 %v1078, 0.0
    %v1083 = vpack.c.bf16 %v1082, %v1081
    %v1084 = vld [vmem:[#allocation8] sm:$0xf]
    %v1085 = vld [vmem:[#allocation8 + $0x4] sm:$0xf]
    %v1086 = vld [vmem:[#allocation8 + $0x8] sm:$0xf]
    %v1087 = vld [vmem:[#allocation8 + $0xc] sm:$0xf]
    %v1088 = vld [vmem:[#allocation8 + $0x10] sm:$0xf]
    %v1089 = vld [vmem:[#allocation8 + $0x14] sm:$0xf]
    %v1090 = vld [vmem:[#allocation8 + $0x18] sm:$0xf]
    %v1091 = vld [vmem:[#allocation8 + $0x1c] sm:$0xf]
    %v1092 = vld [vmem:[#allocation8 + $0x20] sm:$0xf]
    %v1093 = vld [vmem:[#allocation8 + $0x24] sm:$0xf]
    %v1094 = vld [vmem:[#allocation8 + $0x28] sm:$0xf]
    %v1095 = vld [vmem:[#allocation8 + $0x2c] sm:$0xf]
    %v1096 = vld [vmem:[#allocation8 + $0x30] sm:$0xf]
    %v1097 = vld [vmem:[#allocation8 + $0x34] sm:$0xf]
    %v1098 = vld [vmem:[#allocation8 + $0x38] sm:$0xf]
    %v1099 = vld [vmem:[#allocation8 + $0x3c] sm:$0xf]
    %v1100 = vld [vmem:[%s6] sm:$0x1]
    %v1102 = vlaneseq
    %v1103 = vshrl.u32 %v1102, 7
    %v1104 = vsub.s32 0, %v1103
    %v1105 = vrot.slane %v1100, %v1104
    %v1123 = vunpack.c.l.b16 %v1084
    %v1124 = vunpack.c.l.b16 %v1085
    %v1125 = vunpack.c.l.b16 %v1086
    %v1126 = vunpack.c.l.b16 %v1087
    %v1127 = vunpack.c.l.b16 %v1088
    %v1128 = vunpack.c.l.b16 %v1089
    %v1129 = vunpack.c.l.b16 %v1090
    %v1130 = vunpack.c.l.b16 %v1091
    %v1131 = vunpack.c.l.b16 %v1092
    %v1132 = vunpack.c.l.b16 %v1093
    %v1133 = vunpack.c.l.b16 %v1094
    %v1134 = vunpack.c.l.b16 %v1095
    %v1135 = vunpack.c.l.b16 %v1096
    %v1136 = vunpack.c.l.b16 %v1097
    %v1137 = vunpack.c.l.b16 %v1098
    %v1138 = vunpack.c.l.b16 %v1099
    %v1139 = vpack.c.b16 %v1124, %v1123
    %v1140 = vpack.c.b16 %v1126, %v1125
    %v1141 = vpack.c.b16 %v1128, %v1127
    %v1142 = vpack.c.b16 %v1130, %v1129
    %v1143 = vpack.c.b16 %v1132, %v1131
    %v1144 = vpack.c.b16 %v1134, %v1133
    %v1145 = vpack.c.b16 %v1136, %v1135
    %v1146 = vpack.c.b16 %v1138, %v1137
    %1155 = vmatprep.subr.bf16.mxu0 0
    %1156 = vmatpush1.bf16.msra.mxu0 %v1139
    %1157 = vmatprep.subr.bf16.mxu0 0
    %1158 = vmatpush1.bf16.msra.mxu0 %v1140
    %1159 = vmatprep.subr.bf16.mxu0 0
    %1160 = vmatpush1.bf16.msra.mxu0 %v1141
    %1161 = vmatprep.subr.bf16.mxu0 0
    %1162 = vmatpush1.bf16.msra.mxu0 %v1142
    %1163 = vmatprep.subr.bf16.mxu0 0
    %1164 = vmatpush1.bf16.msra.mxu0 %v1143
    %1165 = vmatprep.subr.bf16.mxu0 0
    %1166 = vmatpush1.bf16.msra.mxu0 %v1144
    %1167 = vmatprep.subr.bf16.mxu0 0
    %1168 = vmatpush1.bf16.msra.mxu0 %v1145
    %1169 = vmatprep.subr.bf16.mxu0 0
    %1170 = vmatpush1.bf16.msra.mxu0 %v1146
    %1171 = vmatprep.subr.bf16.mxu0 0
    %1172 = vmatpush1.bf16.msra.mxu0 0
    %1173 = vmatprep.subr.bf16.mxu0 0
    %1174 = vmatpush1.bf16.msra.mxu0 0
    %1175 = vmatprep.subr.bf16.mxu0 0
    %1176 = vmatpush1.bf16.msra.mxu0 0
    %1177 = vmatprep.subr.bf16.mxu0 0
    %1178 = vmatpush1.bf16.msra.mxu0 0
    %1179 = vmatprep.subr.bf16.mxu0 0
    %1180 = vmatpush1.bf16.msra.mxu0 0
    %1181 = vmatprep.subr.bf16.mxu0 0
    %1182 = vmatpush1.bf16.msra.mxu0 0
    %1183 = vmatprep.subr.bf16.mxu0 0
    %1184 = vmatpush1.bf16.msra.mxu0 0
    %1185 = vmatprep.subr.bf16.mxu0 0
    %1186 = vmatpush1.bf16.msra.mxu0 0
    %1187 = vmatprep.mubr.bf16.mxu0 0
    %1188 = vmatmul.mubr.bf16.gmra.mrb[0].mxu0 %v1083
    %v1189 = vpop.f32.mrb[0].mxu0
    %v1190 = vadd.f32 %v1105, %v1189
    %v1191 = vpop.f32.mrb[0].mxu0
    %v1192 = vpop.f32.mrb[0].mxu0
    %v1193 = vadd.f32 %v1105, %v1192
    %v1194 = vpop.f32.mrb[0].mxu0
    %1195 = vdwg.mxu0
    %v1196 = vmax.f32 %v1190, 0.0
    %v1197 = vmax.f32 %v1193, 0.0
    %v1198 = vpack.c.bf16 %v1197, %v1196
    %v1199 = vld [vmem:[#allocation10] sm:$0xf]
    %v1200 = vld [vmem:[#allocation10 + $0x4] sm:$0xf]
    %v1201 = vld [vmem:[#allocation10 + $0x8] sm:$0xf]
    %v1202 = vld [vmem:[#allocation10 + $0xc] sm:$0xf]
    %v1203 = vld [vmem:[#allocation10 + $0x10] sm:$0xf]
    %v1204 = vld [vmem:[#allocation10 + $0x14] sm:$0xf]
    %v1205 = vld [vmem:[#allocation10 + $0x18] sm:$0xf]
    %v1206 = vld [vmem:[#allocation10 + $0x1c] sm:$0xf]
    %v1207 = vld [vmem:[#allocation10 + $0x20] sm:$0xf]
    %v1208 = vld [vmem:[#allocation10 + $0x24] sm:$0xf]
    %v1209 = vld [vmem:[#allocation10 + $0x28] sm:$0xf]
    %v1210 = vld [vmem:[#allocation10 + $0x2c] sm:$0xf]
    %v1211 = vld [vmem:[#allocation10 + $0x30] sm:$0xf]
    %v1212 = vld [vmem:[#allocation10 + $0x34] sm:$0xf]
    %v1213 = vld [vmem:[#allocation10 + $0x38] sm:$0xf]
    %v1214 = vld [vmem:[#allocation10 + $0x3c] sm:$0xf]
    %v1215 = vld [vmem:[%s8] sm:$0x1]
    %v1217 = vlaneseq
    %v1218 = vshrl.u32 %v1217, 7
    %v1219 = vsub.s32 0, %v1218
    %v1220 = vrot.slane %v1215, %v1219
    %v1238 = vunpack.c.l.b16 %v1199
    %v1239 = vunpack.c.l.b16 %v1200
    %v1240 = vunpack.c.l.b16 %v1201
    %v1241 = vunpack.c.l.b16 %v1202
    %v1242 = vunpack.c.l.b16 %v1203
    %v1243 = vunpack.c.l.b16 %v1204
    %v1244 = vunpack.c.l.b16 %v1205
    %v1245 = vunpack.c.l.b16 %v1206
    %v1246 = vunpack.c.l.b16 %v1207
    %v1247 = vunpack.c.l.b16 %v1208
    %v1248 = vunpack.c.l.b16 %v1209
    %v1249 = vunpack.c.l.b16 %v1210
    %v1250 = vunpack.c.l.b16 %v1211
    %v1251 = vunpack.c.l.b16 %v1212
    %v1252 = vunpack.c.l.b16 %v1213
    %v1253 = vunpack.c.l.b16 %v1214
    %v1254 = vpack.c.b16 %v1239, %v1238
    %v1255 = vpack.c.b16 %v1241, %v1240
    %v1256 = vpack.c.b16 %v1243, %v1242
    %v1257 = vpack.c.b16 %v1245, %v1244
    %v1258 = vpack.c.b16 %v1247, %v1246
    %v1259 = vpack.c.b16 %v1249, %v1248
    %v1260 = vpack.c.b16 %v1251, %v1250
    %v1261 = vpack.c.b16 %v1253, %v1252
    %1270 = vmatprep.subr.bf16.mxu0 0
    %1271 = vmatpush1.bf16.msra.mxu0 %v1254
    %1272 = vmatprep.subr.bf16.mxu0 0
    %1273 = vmatpush1.bf16.msra.mxu0 %v1255
    %1274 = vmatprep.subr.bf16.mxu0 0
    %1275 = vmatpush1.bf16.msra.mxu0 %v1256
    %1276 = vmatprep.subr.bf16.mxu0 0
    %1277 = vmatpush1.bf16.msra.mxu0 %v1257
    %1278 = vmatprep.subr.bf16.mxu0 0
    %1279 = vmatpush1.bf16.msra.mxu0 %v1258
    %1280 = vmatprep.subr.bf16.mxu0 0
    %1281 = vmatpush1.bf16.msra.mxu0 %v1259
    %1282 = vmatprep.subr.bf16.mxu0 0
    %1283 = vmatpush1.bf16.msra.mxu0 %v1260
    %1284 = vmatprep.subr.bf16.mxu0 0
    %1285 = vmatpush1.bf16.msra.mxu0 %v1261
    %1286 = vmatprep.subr.bf16.mxu0 0
    %1287 = vmatpush1.bf16.msra.mxu0 0
    %1288 = vmatprep.subr.bf16.mxu0 0
    %1289 = vmatpush1.bf16.msra.mxu0 0
    %1290 = vmatprep.subr.bf16.mxu0 0
    %1291 = vmatpush1.bf16.msra.mxu0 0
    %1292 = vmatprep.subr.bf16.mxu0 0
    %1293 = vmatpush1.bf16.msra.mxu0 0
    %1294 = vmatprep.subr.bf16.mxu0 0
    %1295 = vmatpush1.bf16.msra.mxu0 0
    %1296 = vmatprep.subr.bf16.mxu0 0
    %1297 = vmatpush1.bf16.msra.mxu0 0
    %1298 = vmatprep.subr.bf16.mxu0 0
    %1299 = vmatpush1.bf16.msra.mxu0 0
    %1300 = vmatprep.subr.bf16.mxu0 0
    %1301 = vmatpush1.bf16.msra.mxu0 0
    %1302 = vmatprep.mubr.bf16.mxu0 0
    %1303 = vmatmul.mubr.bf16.gmra.mrb[0].mxu0 %v1198
    %v1304 = vpop.f32.mrb[0].mxu0
    %v1305 = vadd.f32 %v1220, %v1304
    %v1306 = vpop.f32.mrb[0].mxu0
    %v1307 = vpop.f32.mrb[0].mxu0
    %v1308 = vadd.f32 %v1220, %v1307
    %v1309 = vpop.f32.mrb[0].mxu0
    %1310 = vdwg.mxu0
    %v1311 = vpack.c.bf16 %v1308, %v1305
    %v1313 = vunpack.c.l.b16 %v1311
    %v1314 = vunpack.c.h.b16 %v1311
    %v1315 = vpack.c.b16 %v1313, %v1313
    %v1316 = vpack.c.b16 %v1314, %v1314
    %1319 = vst [vmem:[#allocation11] sm:$0xf] %v1315
    %1320 = vst [vmem:[#allocation11 + $0x4] sm:$0xf] %v1316
    // Predicated region
    $region58: #{tpu_custom_call.1} parent=1 // pred_check
      _
    $region59: #{tpu_custom_call.1} parent=1 // pred_check_branch
      %1322 = sbr.rel (0) target = $region61
    $region60: #{tpu_custom_call.1} parent=1 // pred_region
      %s1324 = ssub.s32 128, 128
      %1325 = vsyncadd [#allocation4], %s1324
      %s1326 = sshll.u32 [#allocation11], 4
      %s1327 = int_to_ptr.vmem [resolvable:$true] %s1326
      %1332 = dma.vmem_to_hbm [thread:$0]  %s1327, 128, %s9, [#allocation4], 64, 64, 4
    $region61: #{tpu_custom_call.1} parent=1 // pred_fallthru
      _
    // Predicated region
    $region62: #{tpu_custom_call.1} parent=1 // pred_check
      _
    $region63: #{tpu_custom_call.1} parent=1 // pred_check_branch
      %1334 = sbr.rel (0) target = $region65
    $region64: #{tpu_custom_call.1} parent=1 // pred_region
      %1335 = dma.done [#allocation4], 128
    $region65: #{tpu_custom_call.1} parent=1 // pred_fallthru
      _
    %1336 = vsyncpa [#allocation3], 1
    %1337 = vsyncpa [#allocation6], 1
    %1338 = vsyncpa [#allocation9], 1
    %1339 = vsyncpa [#allocation4], 1

</llo_original>
